<compile_context>
chip_gen: v6e
topology: v6e:2x2x1
jax: 0.10.0
libtpu: 0.0.40
codegen_flags: <defaults>
</compile_context>

<pallas_src>
import numpy as np
import jax
import jax.numpy as jnp
from jax import lax
from jax.experimental import pallas as pl
from jax.experimental.pallas import tpu as pltpu

INPUT_SIZE = 1
HIDDEN = 10
GP = 128          # one 128-lane group holds all four packed gates (lanes [g*H:(g+1)*H])
MAX_B_TILE = 32   # vreg-pressure cap for the fully unrolled recurrence


def lstm_kernel(xw_ref, w_hh_ref, h_out_ref):
    """Unrolled LSTM recurrence, all 4 gates packed into a single 128-lane group.

    xw_ref   : (T, Bt, GP)  precomputed x_t * W_ih + b ; lanes >= 4H are zero
    w_hh_ref : (GP, GP)     recurrent weights; rows >= H and cols >= 4H are zero
    h_out_ref: (Bt, GP)     final hidden state (lanes 0:H meaningful, rest bounded junk)
    """
    T = xw_ref.shape[0]
    Bt = xw_ref.shape[1]
    H = HIDDEN

    w_hh = w_hh_ref[...]                                   # hoisted out of the unrolled loop

    h = jnp.zeros((Bt, GP), jnp.float32)
    c = jnp.zeros((Bt, GP), jnp.float32)

    # Fully unrolled recurrence (T is a small static trip count).
    for t in range(T):
        gates = xw_ref[t] + jnp.dot(h, w_hh, preferred_element_type=jnp.float32)  # (Bt, GP)
        sg = jax.nn.sigmoid(gates)                          # i, f, o live in their lane blocks
        tg = jnp.tanh(gates)                                # g lives in its lane block
        i_t = sg                                            # lanes 0:H already aligned with c/h
        f_t = pltpu.roll(sg, GP - 1 * H, 1)                 # lanes 0:H <- sg[:, H:2H]
        g_t = pltpu.roll(tg, GP - 2 * H, 1)                 # lanes 0:H <- tg[:, 2H:3H]
        o_t = pltpu.roll(sg, GP - 3 * H, 1)                 # lanes 0:H <- sg[:, 3H:4H]
        c = f_t * c + i_t * g_t
        h = o_t * jnp.tanh(c)
        # Junk in lanes >= H is bounded (|.| <= T) and contributes exactly zero to the next
        # matmul because rows >= H of w_hh are zero; only lanes 0:H are consumed downstream.

    h_out_ref[...] = h                                      # lane-dense (Bt, 128) store


def nn_forward(x, params):
    """x: (B, T, 1) float32  ->  (B, 1) float32.  Matches the PyTorch forward."""
    w_ih, w_hh, b, w_lin, b_lin = params   # blitz layout: (1,4H), (H,4H), (1,4H), (H,1), (1,1)
    B, T, F = x.shape
    assert F == INPUT_SIZE
    H = HIDDEN

    # Batch tile: whole (padded) batch up to MAX_B_TILE rows -> grid=(1,) for small batches.
    b_tile = min(((B + 7) // 8) * 8, MAX_B_TILE)
    Bp = ((B + b_tile - 1) // b_tile) * b_tile
    x2d = x[..., 0]                                                     # (B, T)
    if Bp != B:
        x2d = jnp.pad(x2d, ((0, Bp - B), (0, 0)))

    # --- Repack weights: all four gates share one 128-lane group, zero padded. ------
    w_ih_pack = jnp.zeros((1, GP), jnp.float32).at[:, :4 * H].set(w_ih)
    b_pack = jnp.zeros((1, GP), jnp.float32).at[:, :4 * H].set(b)
    w_hh_pack = jnp.zeros((GP, GP), jnp.float32).at[:H, :4 * H].set(w_hh)

    # --- Hoist the input contribution out of the recurrence: (T, Bp, GP). -----------
    xw = x2d.T[:, :, None] * w_ih_pack[None, :, :] + b_pack[None, :, :]

    grid = (Bp // b_tile,)
    h_last = pl.pallas_call(
        lstm_kernel,
        out_shape=jax.ShapeDtypeStruct((Bp, GP), jnp.float32),
        grid=grid,
        in_specs=[
            pl.BlockSpec((T, b_tile, GP), lambda i: (0, i, 0)),
            pl.BlockSpec((GP, GP), lambda i: (0, 0)),
        ],
        out_specs=pl.BlockSpec((b_tile, GP), lambda i: (i, 0)),
        compiler_params=pltpu.CompilerParams(dimension_semantics=("parallel",)),
    )(xw, w_hh_pack)

    # Linear(10, 1) head in XLA: the (B,10)@(10,1) matmul is free and keeps the kernel
    # epilogue lane-dense (no cross-lane reduce / re-broadcast inside the kernel).
    return h_last[:B, :H] @ w_lin + b_lin


def nn_forward_ref(x, params):
    """Pure-JAX reference with the same sampled weights (blitz gate order i,f,g,o)."""
    w_ih, w_hh, b, w_lin, b_lin = params
    B, T, _ = x.shape
    H = HIDDEN

    def step(carry, x_t):
        h, c = carry
        gates = x_t @ w_ih + h @ w_hh + b
        i = jax.nn.sigmoid(gates[:, :H])
        f = jax.nn.sigmoid(gates[:, H:2 * H])
        g = jnp.tanh(gates[:, 2 * H:3 * H])
        o = jax.nn.sigmoid(gates[:, 3 * H:])
        c = f * c + i * g
        h = o * jnp.tanh(c)
        return (h, c), None

    h0 = jnp.zeros((B, H), jnp.float32)
    c0 = jnp.zeros((B, H), jnp.float32)
    (h, _), _ = lax.scan(step, (h0, c0), jnp.swapaxes(x, 0, 1))
    return h @ w_lin + b_lin


def _bayes_sample(key, shape, posterior_mu_std=0.1, posterior_rho_init=-3.0):
    """One reparameterized sample from the Bayesian weight posterior:
       w = mu + softplus(rho) * eps  (mu, rho initialized as in blitz)."""
    k_mu, k_rho, k_eps = jax.random.split(key, 3)
    mu = posterior_mu_std * jax.random.normal(k_mu, shape, jnp.float32)
    rho = posterior_rho_init + 0.1 * jax.random.normal(k_rho, shape, jnp.float32)
    sigma = jnp.log1p(jnp.exp(rho))
    eps = jax.random.normal(k_eps, shape, jnp.float32)
    return mu + sigma * eps


if __name__ == "__main__":
    key = jax.random.PRNGKey(0)
    kx, kih, khh, kb, klw, klb = jax.random.split(key, 6)

    B, T = 16, 8
    x = jax.random.normal(kx, (B, T, INPUT_SIZE), jnp.float32)

    # Deterministically sampled Bayesian LSTM weights (blitz layout: a single fused bias,
    # matching blitz's BayesianLSTM).  The reparameterized sampling is host-side plain JAX;
    # only the deterministic forward runs in-kernel.
    w_ih = _bayes_sample(kih, (INPUT_SIZE, 4 * HIDDEN))
    w_hh = _bayes_sample(khh, (HIDDEN, 4 * HIDDEN))
    b = _bayes_sample(kb, (1, 4 * HIDDEN))

    # nn.Linear(10, 1) parameters (deterministic uniform init).
    bound = 1.0 / np.sqrt(HIDDEN)
    w_lin = jax.random.uniform(klw, (HIDDEN, 1), jnp.float32, -bound, bound)
    b_lin = jax.random.uniform(klb, (1, 1), jnp.float32, -bound, bound)

    params = (w_ih, w_hh, b, w_lin, b_lin)

    out = nn_forward(x, params)
    jax.block_until_ready(out)

    ref = nn_forward_ref(x, params)
    np.testing.assert_allclose(np.asarray(out), np.asarray(ref), rtol=2e-3, atol=2e-3)

    print("KERNEL_OK")
</pallas_src>

<mosaic_0001>
module attributes {stable_mosaic.version = 11 : i64} {
  func.func @lstm_kernel(%arg0: i32, %arg1: memref<8x16x128xf32, #tpu.memory_space<vmem>>, %arg2: memref<128x128xf32, #tpu.memory_space<vmem>>, %arg3: memref<16x128xf32, #tpu.memory_space<vmem>>) attributes {dimension_semantics = [#tpu.dimension_semantics<parallel>], iteration_bounds = array<i64: 1>, scalar_prefetch = 0 : i64, scratch_operands = 0 : i64, tpu.core_type = #tpu.core_type<tc>, window_params = [{transform_indices = @transform_0, window_bounds = array<i64: 8, 16, 128>}, {pipeline_mode = #tpu.pipeline_mode<synchronous>, transform_indices = @transform_1, window_bounds = array<i64: 128, 128>}, {transform_indices = @transform_2, window_bounds = array<i64: 16, 128>}]} {
    %c0 = arith.constant 0 : index
    %c0_0 = arith.constant 0 : index
    %0 = vector.load %arg2[%c0, %c0_0] : memref<128x128xf32, #tpu.memory_space<vmem>>, vector<128x128xf32>
    %cst = arith.constant 0.000000e+00 : f32
    %1 = vector.broadcast %cst : f32 to vector<16x128xf32>
    %cst_1 = arith.constant 0.000000e+00 : f32
    %2 = vector.broadcast %cst_1 : f32 to vector<16x128xf32>
    %c0_2 = arith.constant 0 : index
    %c0_3 = arith.constant 0 : index
    %c0_4 = arith.constant 0 : index
    %3 = vector.load %arg1[%c0_2, %c0_3, %c0_4] : memref<8x16x128xf32, #tpu.memory_space<vmem>>, vector<1x16x128xf32>
    %4 = vector.shape_cast %3 : vector<1x16x128xf32> to vector<16x128xf32>
    %cst_5 = arith.constant dense<0.000000e+00> : vector<16x128xf32>
    %5 = tpu.matmul %1, %0, %cst_5 {dimension_numbers = #tpu.dot_dimension_numbers<[1], [0], [0], [1], [0, 0, 1, 1], [], []>} : vector<16x128xf32>, vector<128x128xf32>, vector<16x128xf32> -> vector<16x128xf32>
    %6 = arith.addf %4, %5 : vector<16x128xf32>
    %7 = arith.negf %6 : vector<16x128xf32>
    %8 = math.exp %7 : vector<16x128xf32>
    %cst_6 = arith.constant 1.000000e+00 : f32
    %9 = vector.broadcast %cst_6 : f32 to vector<16x128xf32>
    %10 = arith.addf %9, %8 : vector<16x128xf32>
    %11 = arith.divf %9, %10 : vector<16x128xf32>
    %12 = math.tanh %6 : vector<16x128xf32>
    %c118_i32 = arith.constant 118 : i32
    %13 = tpu.dynamic_rotate %11 by %c118_i32 dim 1 : vector<16x128xf32>, i32 -> vector<16x128xf32>
    %c108_i32 = arith.constant 108 : i32
    %14 = tpu.dynamic_rotate %12 by %c108_i32 dim 1 : vector<16x128xf32>, i32 -> vector<16x128xf32>
    %c98_i32 = arith.constant 98 : i32
    %15 = tpu.dynamic_rotate %11 by %c98_i32 dim 1 : vector<16x128xf32>, i32 -> vector<16x128xf32>
    %16 = arith.mulf %13, %2 : vector<16x128xf32>
    %17 = arith.mulf %11, %14 : vector<16x128xf32>
    %18 = arith.addf %16, %17 : vector<16x128xf32>
    %19 = math.tanh %18 : vector<16x128xf32>
    %20 = arith.mulf %15, %19 : vector<16x128xf32>
    %c1 = arith.constant 1 : index
    %c0_7 = arith.constant 0 : index
    %c0_8 = arith.constant 0 : index
    %21 = vector.load %arg1[%c1, %c0_7, %c0_8] : memref<8x16x128xf32, #tpu.memory_space<vmem>>, vector<1x16x128xf32>
    %22 = vector.shape_cast %21 : vector<1x16x128xf32> to vector<16x128xf32>
    %cst_9 = arith.constant dense<0.000000e+00> : vector<16x128xf32>
    %23 = tpu.matmul %20, %0, %cst_9 {dimension_numbers = #tpu.dot_dimension_numbers<[1], [0], [0], [1], [0, 0, 1, 1], [], []>} : vector<16x128xf32>, vector<128x128xf32>, vector<16x128xf32> -> vector<16x128xf32>
    %24 = arith.addf %22, %23 : vector<16x128xf32>
    %25 = arith.negf %24 : vector<16x128xf32>
    %26 = math.exp %25 : vector<16x128xf32>
    %cst_10 = arith.constant 1.000000e+00 : f32
    %27 = vector.broadcast %cst_10 : f32 to vector<16x128xf32>
    %28 = arith.addf %27, %26 : vector<16x128xf32>
    %29 = arith.divf %27, %28 : vector<16x128xf32>
    %30 = math.tanh %24 : vector<16x128xf32>
    %c118_i32_11 = arith.constant 118 : i32
    %31 = tpu.dynamic_rotate %29 by %c118_i32_11 dim 1 : vector<16x128xf32>, i32 -> vector<16x128xf32>
    %c108_i32_12 = arith.constant 108 : i32
    %32 = tpu.dynamic_rotate %30 by %c108_i32_12 dim 1 : vector<16x128xf32>, i32 -> vector<16x128xf32>
    %c98_i32_13 = arith.constant 98 : i32
    %33 = tpu.dynamic_rotate %29 by %c98_i32_13 dim 1 : vector<16x128xf32>, i32 -> vector<16x128xf32>
    %34 = arith.mulf %31, %18 : vector<16x128xf32>
    %35 = arith.mulf %29, %32 : vector<16x128xf32>
    %36 = arith.addf %34, %35 : vector<16x128xf32>
    %37 = math.tanh %36 : vector<16x128xf32>
    %38 = arith.mulf %33, %37 : vector<16x128xf32>
    %c2 = arith.constant 2 : index
    %c0_14 = arith.constant 0 : index
    %c0_15 = arith.constant 0 : index
    %39 = vector.load %arg1[%c2, %c0_14, %c0_15] : memref<8x16x128xf32, #tpu.memory_space<vmem>>, vector<1x16x128xf32>
    %40 = vector.shape_cast %39 : vector<1x16x128xf32> to vector<16x128xf32>
    %cst_16 = arith.constant dense<0.000000e+00> : vector<16x128xf32>
    %41 = tpu.matmul %38, %0, %cst_16 {dimension_numbers = #tpu.dot_dimension_numbers<[1], [0], [0], [1], [0, 0, 1, 1], [], []>} : vector<16x128xf32>, vector<128x128xf32>, vector<16x128xf32> -> vector<16x128xf32>
    %42 = arith.addf %40, %41 : vector<16x128xf32>
    %43 = arith.negf %42 : vector<16x128xf32>
    %44 = math.exp %43 : vector<16x128xf32>
    %cst_17 = arith.constant 1.000000e+00 : f32
    %45 = vector.broadcast %cst_17 : f32 to vector<16x128xf32>
    %46 = arith.addf %45, %44 : vector<16x128xf32>
    %47 = arith.divf %45, %46 : vector<16x128xf32>
    %48 = math.tanh %42 : vector<16x128xf32>
    %c118_i32_18 = arith.constant 118 : i32
    %49 = tpu.dynamic_rotate %47 by %c118_i32_18 dim 1 : vector<16x128xf32>, i32 -> vector<16x128xf32>
    %c108_i32_19 = arith.constant 108 : i32
    %50 = tpu.dynamic_rotate %48 by %c108_i32_19 dim 1 : vector<16x128xf32>, i32 -> vector<16x128xf32>
    %c98_i32_20 = arith.constant 98 : i32
    %51 = tpu.dynamic_rotate %47 by %c98_i32_20 dim 1 : vector<16x128xf32>, i32 -> vector<16x128xf32>
    %52 = arith.mulf %49, %36 : vector<16x128xf32>
    %53 = arith.mulf %47, %50 : vector<16x128xf32>
    %54 = arith.addf %52, %53 : vector<16x128xf32>
    %55 = math.tanh %54 : vector<16x128xf32>
    %56 = arith.mulf %51, %55 : vector<16x128xf32>
    %c3 = arith.constant 3 : index
    %c0_21 = arith.constant 0 : index
    %c0_22 = arith.constant 0 : index
    %57 = vector.load %arg1[%c3, %c0_21, %c0_22] : memref<8x16x128xf32, #tpu.memory_space<vmem>>, vector<1x16x128xf32>
    %58 = vector.shape_cast %57 : vector<1x16x128xf32> to vector<16x128xf32>
    %cst_23 = arith.constant dense<0.000000e+00> : vector<16x128xf32>
    %59 = tpu.matmul %56, %0, %cst_23 {dimension_numbers = #tpu.dot_dimension_numbers<[1], [0], [0], [1], [0, 0, 1, 1], [], []>} : vector<16x128xf32>, vector<128x128xf32>, vector<16x128xf32> -> vector<16x128xf32>
    %60 = arith.addf %58, %59 : vector<16x128xf32>
    %61 = arith.negf %60 : vector<16x128xf32>
    %62 = math.exp %61 : vector<16x128xf32>
    %cst_24 = arith.constant 1.000000e+00 : f32
    %63 = vector.broadcast %cst_24 : f32 to vector<16x128xf32>
    %64 = arith.addf %63, %62 : vector<16x128xf32>
    %65 = arith.divf %63, %64 : vector<16x128xf32>
    %66 = math.tanh %60 : vector<16x128xf32>
    %c118_i32_25 = arith.constant 118 : i32
    %67 = tpu.dynamic_rotate %65 by %c118_i32_25 dim 1 : vector<16x128xf32>, i32 -> vector<16x128xf32>
    %c108_i32_26 = arith.constant 108 : i32
    %68 = tpu.dynamic_rotate %66 by %c108_i32_26 dim 1 : vector<16x128xf32>, i32 -> vector<16x128xf32>
    %c98_i32_27 = arith.constant 98 : i32
    %69 = tpu.dynamic_rotate %65 by %c98_i32_27 dim 1 : vector<16x128xf32>, i32 -> vector<16x128xf32>
    %70 = arith.mulf %67, %54 : vector<16x128xf32>
    %71 = arith.mulf %65, %68 : vector<16x128xf32>
    %72 = arith.addf %70, %71 : vector<16x128xf32>
    %73 = math.tanh %72 : vector<16x128xf32>
    %74 = arith.mulf %69, %73 : vector<16x128xf32>
    %c4 = arith.constant 4 : index
    %c0_28 = arith.constant 0 : index
    %c0_29 = arith.constant 0 : index
    %75 = vector.load %arg1[%c4, %c0_28, %c0_29] : memref<8x16x128xf32, #tpu.memory_space<vmem>>, vector<1x16x128xf32>
    %76 = vector.shape_cast %75 : vector<1x16x128xf32> to vector<16x128xf32>
    %cst_30 = arith.constant dense<0.000000e+00> : vector<16x128xf32>
    %77 = tpu.matmul %74, %0, %cst_30 {dimension_numbers = #tpu.dot_dimension_numbers<[1], [0], [0], [1], [0, 0, 1, 1], [], []>} : vector<16x128xf32>, vector<128x128xf32>, vector<16x128xf32> -> vector<16x128xf32>
    %78 = arith.addf %76, %77 : vector<16x128xf32>
    %79 = arith.negf %78 : vector<16x128xf32>
    %80 = math.exp %79 : vector<16x128xf32>
    %cst_31 = arith.constant 1.000000e+00 : f32
    %81 = vector.broadcast %cst_31 : f32 to vector<16x128xf32>
    %82 = arith.addf %81, %80 : vector<16x128xf32>
    %83 = arith.divf %81, %82 : vector<16x128xf32>
    %84 = math.tanh %78 : vector<16x128xf32>
    %c118_i32_32 = arith.constant 118 : i32
    %85 = tpu.dynamic_rotate %83 by %c118_i32_32 dim 1 : vector<16x128xf32>, i32 -> vector<16x128xf32>
    %c108_i32_33 = arith.constant 108 : i32
    %86 = tpu.dynamic_rotate %84 by %c108_i32_33 dim 1 : vector<16x128xf32>, i32 -> vector<16x128xf32>
    %c98_i32_34 = arith.constant 98 : i32
    %87 = tpu.dynamic_rotate %83 by %c98_i32_34 dim 1 : vector<16x128xf32>, i32 -> vector<16x128xf32>
    %88 = arith.mulf %85, %72 : vector<16x128xf32>
    %89 = arith.mulf %83, %86 : vector<16x128xf32>
    %90 = arith.addf %88, %89 : vector<16x128xf32>
    %91 = math.tanh %90 : vector<16x128xf32>
    %92 = arith.mulf %87, %91 : vector<16x128xf32>
    %c5 = arith.constant 5 : index
    %c0_35 = arith.constant 0 : index
    %c0_36 = arith.constant 0 : index
    %93 = vector.load %arg1[%c5, %c0_35, %c0_36] : memref<8x16x128xf32, #tpu.memory_space<vmem>>, vector<1x16x128xf32>
    %94 = vector.shape_cast %93 : vector<1x16x128xf32> to vector<16x128xf32>
    %cst_37 = arith.constant dense<0.000000e+00> : vector<16x128xf32>
    %95 = tpu.matmul %92, %0, %cst_37 {dimension_numbers = #tpu.dot_dimension_numbers<[1], [0], [0], [1], [0, 0, 1, 1], [], []>} : vector<16x128xf32>, vector<128x128xf32>, vector<16x128xf32> -> vector<16x128xf32>
    %96 = arith.addf %94, %95 : vector<16x128xf32>
    %97 = arith.negf %96 : vector<16x128xf32>
    %98 = math.exp %97 : vector<16x128xf32>
    %cst_38 = arith.constant 1.000000e+00 : f32
    %99 = vector.broadcast %cst_38 : f32 to vector<16x128xf32>
    %100 = arith.addf %99, %98 : vector<16x128xf32>
    %101 = arith.divf %99, %100 : vector<16x128xf32>
    %102 = math.tanh %96 : vector<16x128xf32>
    %c118_i32_39 = arith.constant 118 : i32
    %103 = tpu.dynamic_rotate %101 by %c118_i32_39 dim 1 : vector<16x128xf32>, i32 -> vector<16x128xf32>
    %c108_i32_40 = arith.constant 108 : i32
    %104 = tpu.dynamic_rotate %102 by %c108_i32_40 dim 1 : vector<16x128xf32>, i32 -> vector<16x128xf32>
    %c98_i32_41 = arith.constant 98 : i32
    %105 = tpu.dynamic_rotate %101 by %c98_i32_41 dim 1 : vector<16x128xf32>, i32 -> vector<16x128xf32>
    %106 = arith.mulf %103, %90 : vector<16x128xf32>
    %107 = arith.mulf %101, %104 : vector<16x128xf32>
    %108 = arith.addf %106, %107 : vector<16x128xf32>
    %109 = math.tanh %108 : vector<16x128xf32>
    %110 = arith.mulf %105, %109 : vector<16x128xf32>
    %c6 = arith.constant 6 : index
    %c0_42 = arith.constant 0 : index
    %c0_43 = arith.constant 0 : index
    %111 = vector.load %arg1[%c6, %c0_42, %c0_43] : memref<8x16x128xf32, #tpu.memory_space<vmem>>, vector<1x16x128xf32>
    %112 = vector.shape_cast %111 : vector<1x16x128xf32> to vector<16x128xf32>
    %cst_44 = arith.constant dense<0.000000e+00> : vector<16x128xf32>
    %113 = tpu.matmul %110, %0, %cst_44 {dimension_numbers = #tpu.dot_dimension_numbers<[1], [0], [0], [1], [0, 0, 1, 1], [], []>} : vector<16x128xf32>, vector<128x128xf32>, vector<16x128xf32> -> vector<16x128xf32>
    %114 = arith.addf %112, %113 : vector<16x128xf32>
    %115 = arith.negf %114 : vector<16x128xf32>
    %116 = math.exp %115 : vector<16x128xf32>
    %cst_45 = arith.constant 1.000000e+00 : f32
    %117 = vector.broadcast %cst_45 : f32 to vector<16x128xf32>
    %118 = arith.addf %117, %116 : vector<16x128xf32>
    %119 = arith.divf %117, %118 : vector<16x128xf32>
    %120 = math.tanh %114 : vector<16x128xf32>
    %c118_i32_46 = arith.constant 118 : i32
    %121 = tpu.dynamic_rotate %119 by %c118_i32_46 dim 1 : vector<16x128xf32>, i32 -> vector<16x128xf32>
    %c108_i32_47 = arith.constant 108 : i32
    %122 = tpu.dynamic_rotate %120 by %c108_i32_47 dim 1 : vector<16x128xf32>, i32 -> vector<16x128xf32>
    %c98_i32_48 = arith.constant 98 : i32
    %123 = tpu.dynamic_rotate %119 by %c98_i32_48 dim 1 : vector<16x128xf32>, i32 -> vector<16x128xf32>
    %124 = arith.mulf %121, %108 : vector<16x128xf32>
    %125 = arith.mulf %119, %122 : vector<16x128xf32>
    %126 = arith.addf %124, %125 : vector<16x128xf32>
    %127 = math.tanh %126 : vector<16x128xf32>
    %128 = arith.mulf %123, %127 : vector<16x128xf32>
    %c7 = arith.constant 7 : index
    %c0_49 = arith.constant 0 : index
    %c0_50 = arith.constant 0 : index
    %129 = vector.load %arg1[%c7, %c0_49, %c0_50] : memref<8x16x128xf32, #tpu.memory_space<vmem>>, vector<1x16x128xf32>
    %130 = vector.shape_cast %129 : vector<1x16x128xf32> to vector<16x128xf32>
    %cst_51 = arith.constant dense<0.000000e+00> : vector<16x128xf32>
    %131 = tpu.matmul %128, %0, %cst_51 {dimension_numbers = #tpu.dot_dimension_numbers<[1], [0], [0], [1], [0, 0, 1, 1], [], []>} : vector<16x128xf32>, vector<128x128xf32>, vector<16x128xf32> -> vector<16x128xf32>
    %132 = arith.addf %130, %131 : vector<16x128xf32>
    %133 = arith.negf %132 : vector<16x128xf32>
    %134 = math.exp %133 : vector<16x128xf32>
    %cst_52 = arith.constant 1.000000e+00 : f32
    %135 = vector.broadcast %cst_52 : f32 to vector<16x128xf32>
    %136 = arith.addf %135, %134 : vector<16x128xf32>
    %137 = arith.divf %135, %136 : vector<16x128xf32>
    %138 = math.tanh %132 : vector<16x128xf32>
    %c118_i32_53 = arith.constant 118 : i32
    %139 = tpu.dynamic_rotate %137 by %c118_i32_53 dim 1 : vector<16x128xf32>, i32 -> vector<16x128xf32>
    %c108_i32_54 = arith.constant 108 : i32
    %140 = tpu.dynamic_rotate %138 by %c108_i32_54 dim 1 : vector<16x128xf32>, i32 -> vector<16x128xf32>
    %c98_i32_55 = arith.constant 98 : i32
    %141 = tpu.dynamic_rotate %137 by %c98_i32_55 dim 1 : vector<16x128xf32>, i32 -> vector<16x128xf32>
    %142 = arith.mulf %139, %126 : vector<16x128xf32>
    %143 = arith.mulf %137, %140 : vector<16x128xf32>
    %144 = arith.addf %142, %143 : vector<16x128xf32>
    %145 = math.tanh %144 : vector<16x128xf32>
    %146 = arith.mulf %141, %145 : vector<16x128xf32>
    %c0_56 = arith.constant 0 : index
    %c0_57 = arith.constant 0 : index
    %147 = vector.load %arg3[%c0_56, %c0_57] : memref<16x128xf32, #tpu.memory_space<vmem>>, vector<16x128xf32>
    tpu.vector_store %arg3[%c0_56, %c0_57], %146 {strides = array<i32>} : memref<16x128xf32, #tpu.memory_space<vmem>>, vector<16x128xf32>,
    return
  }
  func.func @transform_0(%arg0: i32) -> (i32, i32, i32) {
    %c0_i32 = arith.constant 0 : i32
    %c0_i32_0 = arith.constant 0 : i32
    %c0_i32_1 = arith.constant 0 : i32
    return %c0_i32, %arg0, %c0_i32_0 : i32, i32, i32
  }
  func.func @transform_1(%arg0: i32) -> (i32, i32) {
    %c0_i32 = arith.constant 0 : i32
    %c0_i32_0 = arith.constant 0 : i32
    %c0_i32_1 = arith.constant 0 : i32
    return %c0_i32, %c0_i32_0 : i32, i32
  }
  func.func @transform_2(%arg0: i32) -> (i32, i32) {
    %c0_i32 = arith.constant 0 : i32
    %c0_i32_0 = arith.constant 0 : i32
    return %arg0, %c0_i32 : i32, i32
  }
}

</mosaic_0001>

<llo_original>
// kernel: tpu_custom_call.1
$region0: #{tpu_custom_call.1}
  #allocation0 [shape = 'u32[]', space=smem, size = 0x4, offset = 0x4, fixed_abs, tag = 'smem constant byte address 0x4 - core index']
  #allocation1 [shape = 'u32[144,128]{1,0:T(1,128)}', space=vmem, size = 0x12000, scoped, tag = 'internal scratch']
  %s0 = inlined_call_operand.hbm [shape: f32[8,16,128], index: 0, kind: input, shape index: {}]
  %s1 = inlined_call_operand.hbm [shape: f32[128,128], index: 1, kind: input, shape index: {}]
  %s2 = inlined_call_operand.hbm [shape: f32[16,128], index: 2, kind: output, shape index: {}]
  %s3 = sld [smem:[#allocation0]]
  $region26: #{tpu_custom_call.1} parent=0
    _
  %s5 = ssub.s32 1, %s3
  %s6 = scalar_select 0, %s5, %s3
  $region1: #{tpu_custom_call.1} parent=0
    #allocation2 [shape = 'u8[65536]{0}', space=vmem, size = 0x10000, scoped, tag = 'input window, operand 0, single buffered']
    #allocation3 [shape = 's32[1]{0}', space=sflag, size = 0x4, scoped, tag = 'scoped memory for tpu_custom_call.1']
    #allocation4 [shape = 's32[1]{0}', space=sflag, size = 0x4, scoped, tag = 'scoped memory for tpu_custom_call.1']
    #allocation5 [shape = 'u8[65536]{0}', space=vmem, size = 0x10000, scoped, tag = 'input window, operand 1, single buffered']
    #allocation6 [shape = 's32[1]{0}', space=sflag, size = 0x4, scoped, tag = 'scoped memory for tpu_custom_call.1']
    #allocation7 [shape = 'u8[8192]{0}', space=vmem, size = 0x2000, scoped, tag = 'output window, operand 0, single buffered']
    %7 = vsyncpa [#allocation3], 0
    %8 = vsyncpa [#allocation6], 0
    %9 = vsyncpa [#allocation4], 0
    // Predicated region
    $region2: #{tpu_custom_call.1} parent=1 // pred_check
      _
    $region3: #{tpu_custom_call.1} parent=1 // pred_check_branch
      %11 = sbr.rel (0) target = $region5
    $region4: #{tpu_custom_call.1} parent=1 // pred_region
      %s13 = ssub.s32 2048, 2048
      %14 = vsyncadd [#allocation3], %s13
      %s15 = sshll.u32 [#allocation2], 4
      %s16 = int_to_ptr.vmem [resolvable:$true] %s15
      %21 = dma.hbm_to_vmem [thread:$0]  %s0, 2048, %s16, [#allocation3], 128, 128, 8
    $region5: #{tpu_custom_call.1} parent=1 // pred_fallthru
      _
    // Predicated region
    $region6: #{tpu_custom_call.1} parent=1 // pred_check
      _
    $region7: #{tpu_custom_call.1} parent=1 // pred_check_branch
      %23 = sbr.rel (0) target = $region9
    $region8: #{tpu_custom_call.1} parent=1 // pred_region
      %s25 = ssub.s32 2048, 2048
      %26 = vsyncadd [#allocation6], %s25
      %s27 = sshll.u32 [#allocation5], 4
      %s28 = int_to_ptr.vmem [resolvable:$true] %s27
      %33 = dma.hbm_to_vmem [thread:$0]  %s1, 2048, %s28, [#allocation6], 128, 128, 8
    $region9: #{tpu_custom_call.1} parent=1 // pred_fallthru
      _
    // Predicated region
    $region10: #{tpu_custom_call.1} parent=1 // pred_check
      _
    $region11: #{tpu_custom_call.1} parent=1 // pred_check_branch
      %35 = sbr.rel (0) target = $region13
    $region12: #{tpu_custom_call.1} parent=1 // pred_region
      %36 = dma.done [#allocation3], 2048
    $region13: #{tpu_custom_call.1} parent=1 // pred_fallthru
      _
    // Predicated region
    $region14: #{tpu_custom_call.1} parent=1 // pred_check
      _
    $region15: #{tpu_custom_call.1} parent=1 // pred_check_branch
      %38 = sbr.rel (0) target = $region17
    $region16: #{tpu_custom_call.1} parent=1 // pred_region
      %39 = dma.done [#allocation6], 2048
    $region17: #{tpu_custom_call.1} parent=1 // pred_fallthru
      _
    %v40 = vld [vmem:[#allocation5] sm:$0xff]
    %v41 = vld [vmem:[#allocation5 + $0x8] sm:$0xff]
    %v42 = vld [vmem:[#allocation5 + $0x10] sm:$0xff]
    %v43 = vld [vmem:[#allocation5 + $0x18] sm:$0xff]
    %v44 = vld [vmem:[#allocation5 + $0x20] sm:$0xff]
    %v45 = vld [vmem:[#allocation5 + $0x28] sm:$0xff]
    %v46 = vld [vmem:[#allocation5 + $0x30] sm:$0xff]
    %v47 = vld [vmem:[#allocation5 + $0x38] sm:$0xff]
    %v48 = vld [vmem:[#allocation5 + $0x40] sm:$0xff]
    %v49 = vld [vmem:[#allocation5 + $0x48] sm:$0xff]
    %v50 = vld [vmem:[#allocation5 + $0x50] sm:$0xff]
    %v51 = vld [vmem:[#allocation5 + $0x58] sm:$0xff]
    %v52 = vld [vmem:[#allocation5 + $0x60] sm:$0xff]
    %v53 = vld [vmem:[#allocation5 + $0x68] sm:$0xff]
    %v54 = vld [vmem:[#allocation5 + $0x70] sm:$0xff]
    %v55 = vld [vmem:[#allocation5 + $0x78] sm:$0xff]
    %v56 = vld [vmem:[#allocation2] sm:$0xff]
    %v57 = vld [vmem:[#allocation2 + $0x8] sm:$0xff]
    %58 = vmatprep.subr.mxu0 0.0
    %59 = vmatpush1.msra.mxu0 %v55
    %60 = vmatprep.subr.mxu0 0.0
    %61 = vmatpush1.msra.mxu0 %v54
    %62 = vmatprep.subr.mxu0 0.0
    %63 = vmatpush1.msra.mxu0 %v53
    %64 = vmatprep.subr.mxu0 0.0
    %65 = vmatpush1.msra.mxu0 %v52
    %66 = vmatprep.subr.mxu0 0.0
    %67 = vmatpush1.msra.mxu0 %v51
    %68 = vmatprep.subr.mxu0 0.0
    %69 = vmatpush1.msra.mxu0 %v50
    %70 = vmatprep.subr.mxu0 0.0
    %71 = vmatpush1.msra.mxu0 %v49
    %72 = vmatprep.subr.mxu0 0.0
    %73 = vmatpush1.msra.mxu0 %v48
    %74 = vmatprep.subr.mxu0 0.0
    %75 = vmatpush1.msra.mxu0 %v47
    %76 = vmatprep.subr.mxu0 0.0
    %77 = vmatpush1.msra.mxu0 %v46
    %78 = vmatprep.subr.mxu0 0.0
    %79 = vmatpush1.msra.mxu0 %v45
    %80 = vmatprep.subr.mxu0 0.0
    %81 = vmatpush1.msra.mxu0 %v44
    %82 = vmatprep.subr.mxu0 0.0
    %83 = vmatpush1.msra.mxu0 %v43
    %84 = vmatprep.subr.mxu0 0.0
    %85 = vmatpush1.msra.mxu0 %v42
    %86 = vmatprep.subr.mxu0 0.0
    %87 = vmatpush1.msra.mxu0 %v41
    %88 = vmatprep.subr.mxu0 0.0
    %89 = vmatpush1.msra.mxu0 %v40
    %90 = vmatprep.subr.mxu0 0.0
    %91 = vmatpush2.msra.mxu0 0.0
    %92 = vmatprep.subr.mxu0 0.0
    %93 = vmatpush2.msra.mxu0 0.0
    %94 = vmatprep.subr.mxu0 0.0
    %95 = vmatpush2.msra.mxu0 0.0
    %96 = vmatprep.subr.mxu0 0.0
    %97 = vmatpush2.msra.mxu0 0.0
    %98 = vmatprep.subr.mxu0 0.0
    %99 = vmatpush2.msra.mxu0 0.0
    %100 = vmatprep.subr.mxu0 0.0
    %101 = vmatpush2.msra.mxu0 0.0
    %102 = vmatprep.subr.mxu0 0.0
    %103 = vmatpush2.msra.mxu0 0.0
    %104 = vmatprep.subr.mxu0 0.0
    %105 = vmatpush2.msra.mxu0 0.0
    %106 = vmatprep.subr.mxu0 0.0
    %107 = vmatpush2.msra.mxu0 0.0
    %108 = vmatprep.subr.mxu0 0.0
    %109 = vmatpush2.msra.mxu0 0.0
    %110 = vmatprep.subr.mxu0 0.0
    %111 = vmatpush2.msra.mxu0 0.0
    %112 = vmatprep.subr.mxu0 0.0
    %113 = vmatpush2.msra.mxu0 0.0
    %114 = vmatprep.subr.mxu0 0.0
    %115 = vmatpush2.msra.mxu0 0.0
    %116 = vmatprep.subr.mxu0 0.0
    %117 = vmatpush2.msra.mxu0 0.0
    %118 = vmatprep.subr.mxu0 0.0
    %119 = vmatpush2.msra.mxu0 0.0
    %120 = vmatprep.subr.mxu0 0.0
    %121 = vmatpush2.msra.mxu0 0.0
    %122 = vmatprep.mubr.f32.mxu0 0.0
    %123 = vmatmul.mubr.f32.gmra.mxu0 0.0
    %v124 = vpop.f32.mrf.mxu0
    %v125 = vadd.f32 0.0, %v124
    %v126 = vpop.f32.mrf.mxu0
    %127 = vmatprep.mubr.f32.mxu0 0.0
    %128 = vmatmul.mubr.f32.gmra.mxu0 0.0
    %v129 = vpop.f32.mrf.mxu0
    %v130 = vadd.f32 0.0, %v129
    %v131 = vpop.f32.mrf.mxu0
    %132 = vdwg.mxu0
    %v133 = vadd.f32 %v56, %v125
    %v134 = vadd.f32 %v57, %v130
    %v135 = vxor.u32 %v133, 2147483648
    %v136 = vxor.u32 %v134, 2147483648
    %v137 = vmul.f32 %v135, 1.442695
    %v138 = vpow.pop %v137
    %v139 = vmul.f32 %v136, 1.442695
    %v140 = vpow.pop %v139
    %v141 = vadd.f32 %v138, 1.0
    %v142 = vadd.f32 %v140, 1.0
    %v143 = vrcp.pop %v141
    %v144 = vmul.f32 1.0, %v143
    %v145 = vrcp.pop %v142
    %v146 = vmul.f32 1.0, %v145
    %v147 = vtanh.pop %v133
    %v148 = vtanh.pop %v134
    %149 = vrot.lane.b32.xlu0 %v144, 118
    %v150 = vpop.permute.xlu0 %149
    %151 = vrot.lane.b32.xlu0 %v146, 118
    %v152 = vpop.permute.xlu0 %151
    %153 = vrot.lane.b32.xlu0 %v147, 108
    %v154 = vpop.permute.xlu0 %153
    %155 = vrot.lane.b32.xlu0 %v148, 108
    %v156 = vpop.permute.xlu0 %155
    %157 = vrot.lane.b32.xlu0 %v144, 98
    %v158 = vpop.permute.xlu0 %157
    %159 = vrot.lane.b32.xlu0 %v146, 98
    %v160 = vpop.permute.xlu0 %159
    %v161 = vmul.f32 %v150, 0.0
    %v162 = vmul.f32 %v152, 0.0
    %v163 = vmul.f32 %v144, %v154
    %v164 = vmul.f32 %v146, %v156
    %v165 = vadd.f32 %v161, %v163
    %v166 = vadd.f32 %v162, %v164
    %v167 = vtanh.pop %v165
    %v168 = vtanh.pop %v166
    %v169 = vmul.f32 %v158, %v167
    %v170 = vmul.f32 %v160, %v168
    %s171 = scalar_lea.vmem [#allocation2], 16
    %v172 = vld [vmem:[%s171] sm:$0xff]
    %v173 = vld [vmem:[%s171 + $0x8] sm:$0xff]
    %174 = vmatprep.subr.mxu0 0.0
    %175 = vmatpush1.msra.mxu0 %v55
    %176 = vmatprep.subr.mxu0 0.0
    %177 = vmatpush1.msra.mxu0 %v54
    %178 = vmatprep.subr.mxu0 0.0
    %179 = vmatpush1.msra.mxu0 %v53
    %180 = vmatprep.subr.mxu0 0.0
    %181 = vmatpush1.msra.mxu0 %v52
    %182 = vmatprep.subr.mxu0 0.0
    %183 = vmatpush1.msra.mxu0 %v51
    %184 = vmatprep.subr.mxu0 0.0
    %185 = vmatpush1.msra.mxu0 %v50
    %186 = vmatprep.subr.mxu0 0.0
    %187 = vmatpush1.msra.mxu0 %v49
    %188 = vmatprep.subr.mxu0 0.0
    %189 = vmatpush1.msra.mxu0 %v48
    %190 = vmatprep.subr.mxu0 0.0
    %191 = vmatpush1.msra.mxu0 %v47
    %192 = vmatprep.subr.mxu0 0.0
    %193 = vmatpush1.msra.mxu0 %v46
    %194 = vmatprep.subr.mxu0 0.0
    %195 = vmatpush1.msra.mxu0 %v45
    %196 = vmatprep.subr.mxu0 0.0
    %197 = vmatpush1.msra.mxu0 %v44
    %198 = vmatprep.subr.mxu0 0.0
    %199 = vmatpush1.msra.mxu0 %v43
    %200 = vmatprep.subr.mxu0 0.0
    %201 = vmatpush1.msra.mxu0 %v42
    %202 = vmatprep.subr.mxu0 0.0
    %203 = vmatpush1.msra.mxu0 %v41
    %204 = vmatprep.subr.mxu0 0.0
    %205 = vmatpush1.msra.mxu0 %v40
    %206 = vmatprep.subr.mxu0 0.0
    %207 = vmatpush2.msra.mxu0 0.0
    %208 = vmatprep.subr.mxu0 0.0
    %209 = vmatpush2.msra.mxu0 0.0
    %210 = vmatprep.subr.mxu0 0.0
    %211 = vmatpush2.msra.mxu0 0.0
    %212 = vmatprep.subr.mxu0 0.0
    %213 = vmatpush2.msra.mxu0 0.0
    %214 = vmatprep.subr.mxu0 0.0
    %215 = vmatpush2.msra.mxu0 0.0
    %216 = vmatprep.subr.mxu0 0.0
    %217 = vmatpush2.msra.mxu0 0.0
    %218 = vmatprep.subr.mxu0 0.0
    %219 = vmatpush2.msra.mxu0 0.0
    %220 = vmatprep.subr.mxu0 0.0
    %221 = vmatpush2.msra.mxu0 0.0
    %222 = vmatprep.subr.mxu0 0.0
    %223 = vmatpush2.msra.mxu0 0.0
    %224 = vmatprep.subr.mxu0 0.0
    %225 = vmatpush2.msra.mxu0 0.0
    %226 = vmatprep.subr.mxu0 0.0
    %227 = vmatpush2.msra.mxu0 0.0
    %228 = vmatprep.subr.mxu0 0.0
    %229 = vmatpush2.msra.mxu0 0.0
    %230 = vmatprep.subr.mxu0 0.0
    %231 = vmatpush2.msra.mxu0 0.0
    %232 = vmatprep.subr.mxu0 0.0
    %233 = vmatpush2.msra.mxu0 0.0
    %234 = vmatprep.subr.mxu0 0.0
    %235 = vmatpush2.msra.mxu0 0.0
    %236 = vmatprep.subr.mxu0 0.0
    %237 = vmatpush2.msra.mxu0 0.0
    %238 = vmatprep.mubr.f32.mxu0 0.0
    %239 = vmatmul.mubr.f32.gmra.mxu0 %v169
    %v240 = vpop.f32.mrf.mxu0
    %v241 = vadd.f32 0.0, %v240
    %v242 = vpop.f32.mrf.mxu0
    %243 = vmatprep.mubr.f32.mxu0 0.0
    %244 = vmatmul.mubr.f32.gmra.mxu0 %v170
    %v245 = vpop.f32.mrf.mxu0
    %v246 = vadd.f32 0.0, %v245
    %v247 = vpop.f32.mrf.mxu0
    %248 = vdwg.mxu0
    %v249 = vadd.f32 %v172, %v241
    %v250 = vadd.f32 %v173, %v246
    %v251 = vxor.u32 %v249, 2147483648
    %v252 = vxor.u32 %v250, 2147483648
    %v253 = vmul.f32 %v251, 1.442695
    %v254 = vpow.pop %v253
    %v255 = vmul.f32 %v252, 1.442695
    %v256 = vpow.pop %v255
    %v257 = vadd.f32 %v254, 1.0
    %v258 = vadd.f32 %v256, 1.0
    %v259 = vrcp.pop %v257
    %v260 = vmul.f32 1.0, %v259
    %v261 = vrcp.pop %v258
    %v262 = vmul.f32 1.0, %v261
    %v263 = vtanh.pop %v249
    %v264 = vtanh.pop %v250
    %265 = vrot.lane.b32.xlu0 %v260, 118
    %v266 = vpop.permute.xlu0 %265
    %267 = vrot.lane.b32.xlu0 %v262, 118
    %v268 = vpop.permute.xlu0 %267
    %269 = vrot.lane.b32.xlu0 %v263, 108
    %v270 = vpop.permute.xlu0 %269
    %271 = vrot.lane.b32.xlu0 %v264, 108
    %v272 = vpop.permute.xlu0 %271
    %273 = vrot.lane.b32.xlu0 %v260, 98
    %v274 = vpop.permute.xlu0 %273
    %275 = vrot.lane.b32.xlu0 %v262, 98
    %v276 = vpop.permute.xlu0 %275
    %v277 = vmul.f32 %v266, %v165
    %v278 = vmul.f32 %v268, %v166
    %v279 = vmul.f32 %v260, %v270
    %v280 = vmul.f32 %v262, %v272
    %v281 = vadd.f32 %v277, %v279
    %v282 = vadd.f32 %v278, %v280
    %v283 = vtanh.pop %v281
    %v284 = vtanh.pop %v282
    %v285 = vmul.f32 %v274, %v283
    %v286 = vmul.f32 %v276, %v284
    %s287 = scalar_lea.vmem [#allocation2], 32
    %v288 = vld [vmem:[%s287] sm:$0xff]
    %v289 = vld [vmem:[%s287 + $0x8] sm:$0xff]
    %290 = vmatprep.subr.mxu0 0.0
    %291 = vmatpush1.msra.mxu0 %v55
    %292 = vmatprep.subr.mxu0 0.0
    %293 = vmatpush1.msra.mxu0 %v54
    %294 = vmatprep.subr.mxu0 0.0
    %295 = vmatpush1.msra.mxu0 %v53
    %296 = vmatprep.subr.mxu0 0.0
    %297 = vmatpush1.msra.mxu0 %v52
    %298 = vmatprep.subr.mxu0 0.0
    %299 = vmatpush1.msra.mxu0 %v51
    %300 = vmatprep.subr.mxu0 0.0
    %301 = vmatpush1.msra.mxu0 %v50
    %302 = vmatprep.subr.mxu0 0.0
    %303 = vmatpush1.msra.mxu0 %v49
    %304 = vmatprep.subr.mxu0 0.0
    %305 = vmatpush1.msra.mxu0 %v48
    %306 = vmatprep.subr.mxu0 0.0
    %307 = vmatpush1.msra.mxu0 %v47
    %308 = vmatprep.subr.mxu0 0.0
    %309 = vmatpush1.msra.mxu0 %v46
    %310 = vmatprep.subr.mxu0 0.0
    %311 = vmatpush1.msra.mxu0 %v45
    %312 = vmatprep.subr.mxu0 0.0
    %313 = vmatpush1.msra.mxu0 %v44
    %314 = vmatprep.subr.mxu0 0.0
    %315 = vmatpush1.msra.mxu0 %v43
    %316 = vmatprep.subr.mxu0 0.0
    %317 = vmatpush1.msra.mxu0 %v42
    %318 = vmatprep.subr.mxu0 0.0
    %319 = vmatpush1.msra.mxu0 %v41
    %320 = vmatprep.subr.mxu0 0.0
    %321 = vmatpush1.msra.mxu0 %v40
    %322 = vmatprep.subr.mxu0 0.0
    %323 = vmatpush2.msra.mxu0 0.0
    %324 = vmatprep.subr.mxu0 0.0
    %325 = vmatpush2.msra.mxu0 0.0
    %326 = vmatprep.subr.mxu0 0.0
    %327 = vmatpush2.msra.mxu0 0.0
    %328 = vmatprep.subr.mxu0 0.0
    %329 = vmatpush2.msra.mxu0 0.0
    %330 = vmatprep.subr.mxu0 0.0
    %331 = vmatpush2.msra.mxu0 0.0
    %332 = vmatprep.subr.mxu0 0.0
    %333 = vmatpush2.msra.mxu0 0.0
    %334 = vmatprep.subr.mxu0 0.0
    %335 = vmatpush2.msra.mxu0 0.0
    %336 = vmatprep.subr.mxu0 0.0
    %337 = vmatpush2.msra.mxu0 0.0
    %338 = vmatprep.subr.mxu0 0.0
    %339 = vmatpush2.msra.mxu0 0.0
    %340 = vmatprep.subr.mxu0 0.0
    %341 = vmatpush2.msra.mxu0 0.0
    %342 = vmatprep.subr.mxu0 0.0
    %343 = vmatpush2.msra.mxu0 0.0
    %344 = vmatprep.subr.mxu0 0.0
    %345 = vmatpush2.msra.mxu0 0.0
    %346 = vmatprep.subr.mxu0 0.0
    %347 = vmatpush2.msra.mxu0 0.0
    %348 = vmatprep.subr.mxu0 0.0
    %349 = vmatpush2.msra.mxu0 0.0
    %350 = vmatprep.subr.mxu0 0.0
    %351 = vmatpush2.msra.mxu0 0.0
    %352 = vmatprep.subr.mxu0 0.0
    %353 = vmatpush2.msra.mxu0 0.0
    %354 = vmatprep.mubr.f32.mxu0 0.0
    %355 = vmatmul.mubr.f32.gmra.mxu0 %v285
    %v356 = vpop.f32.mrf.mxu0
    %v357 = vadd.f32 0.0, %v356
    %v358 = vpop.f32.mrf.mxu0
    %359 = vmatprep.mubr.f32.mxu0 0.0
    %360 = vmatmul.mubr.f32.gmra.mxu0 %v286
    %v361 = vpop.f32.mrf.mxu0
    %v362 = vadd.f32 0.0, %v361
    %v363 = vpop.f32.mrf.mxu0
    %364 = vdwg.mxu0
    %v365 = vadd.f32 %v288, %v357
    %v366 = vadd.f32 %v289, %v362
    %v367 = vxor.u32 %v365, 2147483648
    %v368 = vxor.u32 %v366, 2147483648
    %v369 = vmul.f32 %v367, 1.442695
    %v370 = vpow.pop %v369
    %v371 = vmul.f32 %v368, 1.442695
    %v372 = vpow.pop %v371
    %v373 = vadd.f32 %v370, 1.0
    %v374 = vadd.f32 %v372, 1.0
    %v375 = vrcp.pop %v373
    %v376 = vmul.f32 1.0, %v375
    %v377 = vrcp.pop %v374
    %v378 = vmul.f32 1.0, %v377
    %v379 = vtanh.pop %v365
    %v380 = vtanh.pop %v366
    %381 = vrot.lane.b32.xlu0 %v376, 118
    %v382 = vpop.permute.xlu0 %381
    %383 = vrot.lane.b32.xlu0 %v378, 118
    %v384 = vpop.permute.xlu0 %383
    %385 = vrot.lane.b32.xlu0 %v379, 108
    %v386 = vpop.permute.xlu0 %385
    %387 = vrot.lane.b32.xlu0 %v380, 108
    %v388 = vpop.permute.xlu0 %387
    %389 = vrot.lane.b32.xlu0 %v376, 98
    %v390 = vpop.permute.xlu0 %389
    %391 = vrot.lane.b32.xlu0 %v378, 98
    %v392 = vpop.permute.xlu0 %391
    %v393 = vmul.f32 %v382, %v281
    %v394 = vmul.f32 %v384, %v282
    %v395 = vmul.f32 %v376, %v386
    %v396 = vmul.f32 %v378, %v388
    %v397 = vadd.f32 %v393, %v395
    %v398 = vadd.f32 %v394, %v396
    %v399 = vtanh.pop %v397
    %v400 = vtanh.pop %v398
    %v401 = vmul.f32 %v390, %v399
    %v402 = vmul.f32 %v392, %v400
    %s403 = scalar_lea.vmem [#allocation2], 48
    %v404 = vld [vmem:[%s403] sm:$0xff]
    %v405 = vld [vmem:[%s403 + $0x8] sm:$0xff]
    %406 = vmatprep.subr.mxu0 0.0
    %407 = vmatpush1.msra.mxu0 %v55
    %408 = vmatprep.subr.mxu0 0.0
    %409 = vmatpush1.msra.mxu0 %v54
    %410 = vmatprep.subr.mxu0 0.0
    %411 = vmatpush1.msra.mxu0 %v53
    %412 = vmatprep.subr.mxu0 0.0
    %413 = vmatpush1.msra.mxu0 %v52
    %414 = vmatprep.subr.mxu0 0.0
    %415 = vmatpush1.msra.mxu0 %v51
    %416 = vmatprep.subr.mxu0 0.0
    %417 = vmatpush1.msra.mxu0 %v50
    %418 = vmatprep.subr.mxu0 0.0
    %419 = vmatpush1.msra.mxu0 %v49
    %420 = vmatprep.subr.mxu0 0.0
    %421 = vmatpush1.msra.mxu0 %v48
    %422 = vmatprep.subr.mxu0 0.0
    %423 = vmatpush1.msra.mxu0 %v47
    %424 = vmatprep.subr.mxu0 0.0
    %425 = vmatpush1.msra.mxu0 %v46
    %426 = vmatprep.subr.mxu0 0.0
    %427 = vmatpush1.msra.mxu0 %v45
    %428 = vmatprep.subr.mxu0 0.0
    %429 = vmatpush1.msra.mxu0 %v44
    %430 = vmatprep.subr.mxu0 0.0
    %431 = vmatpush1.msra.mxu0 %v43
    %432 = vmatprep.subr.mxu0 0.0
    %433 = vmatpush1.msra.mxu0 %v42
    %434 = vmatprep.subr.mxu0 0.0
    %435 = vmatpush1.msra.mxu0 %v41
    %436 = vmatprep.subr.mxu0 0.0
    %437 = vmatpush1.msra.mxu0 %v40
    %438 = vmatprep.subr.mxu0 0.0
    %439 = vmatpush2.msra.mxu0 0.0
    %440 = vmatprep.subr.mxu0 0.0
    %441 = vmatpush2.msra.mxu0 0.0
    %442 = vmatprep.subr.mxu0 0.0
    %443 = vmatpush2.msra.mxu0 0.0
    %444 = vmatprep.subr.mxu0 0.0
    %445 = vmatpush2.msra.mxu0 0.0
    %446 = vmatprep.subr.mxu0 0.0
    %447 = vmatpush2.msra.mxu0 0.0
    %448 = vmatprep.subr.mxu0 0.0
    %449 = vmatpush2.msra.mxu0 0.0
    %450 = vmatprep.subr.mxu0 0.0
    %451 = vmatpush2.msra.mxu0 0.0
    %452 = vmatprep.subr.mxu0 0.0
    %453 = vmatpush2.msra.mxu0 0.0
    %454 = vmatprep.subr.mxu0 0.0
    %455 = vmatpush2.msra.mxu0 0.0
    %456 = vmatprep.subr.mxu0 0.0
    %457 = vmatpush2.msra.mxu0 0.0
    %458 = vmatprep.subr.mxu0 0.0
    %459 = vmatpush2.msra.mxu0 0.0
    %460 = vmatprep.subr.mxu0 0.0
    %461 = vmatpush2.msra.mxu0 0.0
    %462 = vmatprep.subr.mxu0 0.0
    %463 = vmatpush2.msra.mxu0 0.0
    %464 = vmatprep.subr.mxu0 0.0
    %465 = vmatpush2.msra.mxu0 0.0
    %466 = vmatprep.subr.mxu0 0.0
    %467 = vmatpush2.msra.mxu0 0.0
    %468 = vmatprep.subr.mxu0 0.0
    %469 = vmatpush2.msra.mxu0 0.0
    %470 = vmatprep.mubr.f32.mxu0 0.0
    %471 = vmatmul.mubr.f32.gmra.mxu0 %v401
    %v472 = vpop.f32.mrf.mxu0
    %v473 = vadd.f32 0.0, %v472
    %v474 = vpop.f32.mrf.mxu0
    %475 = vmatprep.mubr.f32.mxu0 0.0
    %476 = vmatmul.mubr.f32.gmra.mxu0 %v402
    %v477 = vpop.f32.mrf.mxu0
    %v478 = vadd.f32 0.0, %v477
    %v479 = vpop.f32.mrf.mxu0
    %480 = vdwg.mxu0
    %v481 = vadd.f32 %v404, %v473
    %v482 = vadd.f32 %v405, %v478
    %v483 = vxor.u32 %v481, 2147483648
    %v484 = vxor.u32 %v482, 2147483648
    %v485 = vmul.f32 %v483, 1.442695
    %v486 = vpow.pop %v485
    %v487 = vmul.f32 %v484, 1.442695
    %v488 = vpow.pop %v487
    %v489 = vadd.f32 %v486, 1.0
    %v490 = vadd.f32 %v488, 1.0
    %v491 = vrcp.pop %v489
    %v492 = vmul.f32 1.0, %v491
    %v493 = vrcp.pop %v490
    %v494 = vmul.f32 1.0, %v493
    %v495 = vtanh.pop %v481
    %v496 = vtanh.pop %v482
    %497 = vrot.lane.b32.xlu0 %v492, 118
    %v498 = vpop.permute.xlu0 %497
    %499 = vrot.lane.b32.xlu0 %v494, 118
    %v500 = vpop.permute.xlu0 %499
    %501 = vrot.lane.b32.xlu0 %v495, 108
    %v502 = vpop.permute.xlu0 %501
    %503 = vrot.lane.b32.xlu0 %v496, 108
    %v504 = vpop.permute.xlu0 %503
    %505 = vrot.lane.b32.xlu0 %v492, 98
    %v506 = vpop.permute.xlu0 %505
    %507 = vrot.lane.b32.xlu0 %v494, 98
    %v508 = vpop.permute.xlu0 %507
    %v509 = vmul.f32 %v498, %v397
    %v510 = vmul.f32 %v500, %v398
    %v511 = vmul.f32 %v492, %v502
    %v512 = vmul.f32 %v494, %v504
    %v513 = vadd.f32 %v509, %v511
    %v514 = vadd.f32 %v510, %v512
    %v515 = vtanh.pop %v513
    %v516 = vtanh.pop %v514
    %v517 = vmul.f32 %v506, %v515
    %v518 = vmul.f32 %v508, %v516
    %s519 = scalar_lea.vmem [#allocation2], 64
    %v520 = vld [vmem:[%s519] sm:$0xff]
    %v521 = vld [vmem:[%s519 + $0x8] sm:$0xff]
    %522 = vmatprep.subr.mxu0 0.0
    %523 = vmatpush1.msra.mxu0 %v55
    %524 = vmatprep.subr.mxu0 0.0
    %525 = vmatpush1.msra.mxu0 %v54
    %526 = vmatprep.subr.mxu0 0.0
    %527 = vmatpush1.msra.mxu0 %v53
    %528 = vmatprep.subr.mxu0 0.0
    %529 = vmatpush1.msra.mxu0 %v52
    %530 = vmatprep.subr.mxu0 0.0
    %531 = vmatpush1.msra.mxu0 %v51
    %532 = vmatprep.subr.mxu0 0.0
    %533 = vmatpush1.msra.mxu0 %v50
    %534 = vmatprep.subr.mxu0 0.0
    %535 = vmatpush1.msra.mxu0 %v49
    %536 = vmatprep.subr.mxu0 0.0
    %537 = vmatpush1.msra.mxu0 %v48
    %538 = vmatprep.subr.mxu0 0.0
    %539 = vmatpush1.msra.mxu0 %v47
    %540 = vmatprep.subr.mxu0 0.0
    %541 = vmatpush1.msra.mxu0 %v46
    %542 = vmatprep.subr.mxu0 0.0
    %543 = vmatpush1.msra.mxu0 %v45
    %544 = vmatprep.subr.mxu0 0.0
    %545 = vmatpush1.msra.mxu0 %v44
    %546 = vmatprep.subr.mxu0 0.0
    %547 = vmatpush1.msra.mxu0 %v43
    %548 = vmatprep.subr.mxu0 0.0
    %549 = vmatpush1.msra.mxu0 %v42
    %550 = vmatprep.subr.mxu0 0.0
    %551 = vmatpush1.msra.mxu0 %v41
    %552 = vmatprep.subr.mxu0 0.0
    %553 = vmatpush1.msra.mxu0 %v40
    %554 = vmatprep.subr.mxu0 0.0
    %555 = vmatpush2.msra.mxu0 0.0
    %556 = vmatprep.subr.mxu0 0.0
    %557 = vmatpush2.msra.mxu0 0.0
    %558 = vmatprep.subr.mxu0 0.0
    %559 = vmatpush2.msra.mxu0 0.0
    %560 = vmatprep.subr.mxu0 0.0
    %561 = vmatpush2.msra.mxu0 0.0
    %562 = vmatprep.subr.mxu0 0.0
    %563 = vmatpush2.msra.mxu0 0.0
    %564 = vmatprep.subr.mxu0 0.0
    %565 = vmatpush2.msra.mxu0 0.0
    %566 = vmatprep.subr.mxu0 0.0
    %567 = vmatpush2.msra.mxu0 0.0
    %568 = vmatprep.subr.mxu0 0.0
    %569 = vmatpush2.msra.mxu0 0.0
    %570 = vmatprep.subr.mxu0 0.0
    %571 = vmatpush2.msra.mxu0 0.0
    %572 = vmatprep.subr.mxu0 0.0
    %573 = vmatpush2.msra.mxu0 0.0
    %574 = vmatprep.subr.mxu0 0.0
    %575 = vmatpush2.msra.mxu0 0.0
    %576 = vmatprep.subr.mxu0 0.0
    %577 = vmatpush2.msra.mxu0 0.0
    %578 = vmatprep.subr.mxu0 0.0
    %579 = vmatpush2.msra.mxu0 0.0
    %580 = vmatprep.subr.mxu0 0.0
    %581 = vmatpush2.msra.mxu0 0.0
    %582 = vmatprep.subr.mxu0 0.0
    %583 = vmatpush2.msra.mxu0 0.0
    %584 = vmatprep.subr.mxu0 0.0
    %585 = vmatpush2.msra.mxu0 0.0
    %586 = vmatprep.mubr.f32.mxu0 0.0
    %587 = vmatmul.mubr.f32.gmra.mxu0 %v517
    %v588 = vpop.f32.mrf.mxu0
    %v589 = vadd.f32 0.0, %v588
    %v590 = vpop.f32.mrf.mxu0
    %591 = vmatprep.mubr.f32.mxu0 0.0
    %592 = vmatmul.mubr.f32.gmra.mxu0 %v518
    %v593 = vpop.f32.mrf.mxu0
    %v594 = vadd.f32 0.0, %v593
    %v595 = vpop.f32.mrf.mxu0
    %596 = vdwg.mxu0
    %v597 = vadd.f32 %v520, %v589
    %v598 = vadd.f32 %v521, %v594
    %v599 = vxor.u32 %v597, 2147483648
    %v600 = vxor.u32 %v598, 2147483648
    %v601 = vmul.f32 %v599, 1.442695
    %v602 = vpow.pop %v601
    %v603 = vmul.f32 %v600, 1.442695
    %v604 = vpow.pop %v603
    %v605 = vadd.f32 %v602, 1.0
    %v606 = vadd.f32 %v604, 1.0
    %v607 = vrcp.pop %v605
    %v608 = vmul.f32 1.0, %v607
    %v609 = vrcp.pop %v606
    %v610 = vmul.f32 1.0, %v609
    %v611 = vtanh.pop %v597
    %v612 = vtanh.pop %v598
    %613 = vrot.lane.b32.xlu0 %v608, 118
    %v614 = vpop.permute.xlu0 %613
    %615 = vrot.lane.b32.xlu0 %v610, 118
    %v616 = vpop.permute.xlu0 %615
    %617 = vrot.lane.b32.xlu0 %v611, 108
    %v618 = vpop.permute.xlu0 %617
    %619 = vrot.lane.b32.xlu0 %v612, 108
    %v620 = vpop.permute.xlu0 %619
    %621 = vrot.lane.b32.xlu0 %v608, 98
    %v622 = vpop.permute.xlu0 %621
    %623 = vrot.lane.b32.xlu0 %v610, 98
    %v624 = vpop.permute.xlu0 %623
    %v625 = vmul.f32 %v614, %v513
    %v626 = vmul.f32 %v616, %v514
    %v627 = vmul.f32 %v608, %v618
    %v628 = vmul.f32 %v610, %v620
    %v629 = vadd.f32 %v625, %v627
    %v630 = vadd.f32 %v626, %v628
    %v631 = vtanh.pop %v629
    %v632 = vtanh.pop %v630
    %v633 = vmul.f32 %v622, %v631
    %v634 = vmul.f32 %v624, %v632
    %s635 = scalar_lea.vmem [#allocation2], 80
    %v636 = vld [vmem:[%s635] sm:$0xff]
    %v637 = vld [vmem:[%s635 + $0x8] sm:$0xff]
    %638 = vmatprep.subr.mxu0 0.0
    %639 = vmatpush1.msra.mxu0 %v55
    %640 = vmatprep.subr.mxu0 0.0
    %641 = vmatpush1.msra.mxu0 %v54
    %642 = vmatprep.subr.mxu0 0.0
    %643 = vmatpush1.msra.mxu0 %v53
    %644 = vmatprep.subr.mxu0 0.0
    %645 = vmatpush1.msra.mxu0 %v52
    %646 = vmatprep.subr.mxu0 0.0
    %647 = vmatpush1.msra.mxu0 %v51
    %648 = vmatprep.subr.mxu0 0.0
    %649 = vmatpush1.msra.mxu0 %v50
    %650 = vmatprep.subr.mxu0 0.0
    %651 = vmatpush1.msra.mxu0 %v49
    %652 = vmatprep.subr.mxu0 0.0
    %653 = vmatpush1.msra.mxu0 %v48
    %654 = vmatprep.subr.mxu0 0.0
    %655 = vmatpush1.msra.mxu0 %v47
    %656 = vmatprep.subr.mxu0 0.0
    %657 = vmatpush1.msra.mxu0 %v46
    %658 = vmatprep.subr.mxu0 0.0
    %659 = vmatpush1.msra.mxu0 %v45
    %660 = vmatprep.subr.mxu0 0.0
    %661 = vmatpush1.msra.mxu0 %v44
    %662 = vmatprep.subr.mxu0 0.0
    %663 = vmatpush1.msra.mxu0 %v43
    %664 = vmatprep.subr.mxu0 0.0
    %665 = vmatpush1.msra.mxu0 %v42
    %666 = vmatprep.subr.mxu0 0.0
    %667 = vmatpush1.msra.mxu0 %v41
    %668 = vmatprep.subr.mxu0 0.0
    %669 = vmatpush1.msra.mxu0 %v40
    %670 = vmatprep.subr.mxu0 0.0
    %671 = vmatpush2.msra.mxu0 0.0
    %672 = vmatprep.subr.mxu0 0.0
    %673 = vmatpush2.msra.mxu0 0.0
    %674 = vmatprep.subr.mxu0 0.0
    %675 = vmatpush2.msra.mxu0 0.0
    %676 = vmatprep.subr.mxu0 0.0
    %677 = vmatpush2.msra.mxu0 0.0
    %678 = vmatprep.subr.mxu0 0.0
    %679 = vmatpush2.msra.mxu0 0.0
    %680 = vmatprep.subr.mxu0 0.0
    %681 = vmatpush2.msra.mxu0 0.0
    %682 = vmatprep.subr.mxu0 0.0
    %683 = vmatpush2.msra.mxu0 0.0
    %684 = vmatprep.subr.mxu0 0.0
    %685 = vmatpush2.msra.mxu0 0.0
    %686 = vmatprep.subr.mxu0 0.0
    %687 = vmatpush2.msra.mxu0 0.0
    %688 = vmatprep.subr.mxu0 0.0
    %689 = vmatpush2.msra.mxu0 0.0
    %690 = vmatprep.subr.mxu0 0.0
    %691 = vmatpush2.msra.mxu0 0.0
    %692 = vmatprep.subr.mxu0 0.0
    %693 = vmatpush2.msra.mxu0 0.0
    %694 = vmatprep.subr.mxu0 0.0
    %695 = vmatpush2.msra.mxu0 0.0
    %696 = vmatprep.subr.mxu0 0.0
    %697 = vmatpush2.msra.mxu0 0.0
    %698 = vmatprep.subr.mxu0 0.0
    %699 = vmatpush2.msra.mxu0 0.0
    %700 = vmatprep.subr.mxu0 0.0
    %701 = vmatpush2.msra.mxu0 0.0
    %702 = vmatprep.mubr.f32.mxu0 0.0
    %703 = vmatmul.mubr.f32.gmra.mxu0 %v633
    %v704 = vpop.f32.mrf.mxu0
    %v705 = vadd.f32 0.0, %v704
    %v706 = vpop.f32.mrf.mxu0
    %707 = vmatprep.mubr.f32.mxu0 0.0
    %708 = vmatmul.mubr.f32.gmra.mxu0 %v634
    %v709 = vpop.f32.mrf.mxu0
    %v710 = vadd.f32 0.0, %v709
    %v711 = vpop.f32.mrf.mxu0
    %712 = vdwg.mxu0
    %v713 = vadd.f32 %v636, %v705
    %v714 = vadd.f32 %v637, %v710
    %v715 = vxor.u32 %v713, 2147483648
    %v716 = vxor.u32 %v714, 2147483648
    %v717 = vmul.f32 %v715, 1.442695
    %v718 = vpow.pop %v717
    %v719 = vmul.f32 %v716, 1.442695
    %v720 = vpow.pop %v719
    %v721 = vadd.f32 %v718, 1.0
    %v722 = vadd.f32 %v720, 1.0
    %v723 = vrcp.pop %v721
    %v724 = vmul.f32 1.0, %v723
    %v725 = vrcp.pop %v722
    %v726 = vmul.f32 1.0, %v725
    %v727 = vtanh.pop %v713
    %v728 = vtanh.pop %v714
    %729 = vrot.lane.b32.xlu0 %v724, 118
    %v730 = vpop.permute.xlu0 %729
    %731 = vrot.lane.b32.xlu0 %v726, 118
    %v732 = vpop.permute.xlu0 %731
    %733 = vrot.lane.b32.xlu0 %v727, 108
    %v734 = vpop.permute.xlu0 %733
    %735 = vrot.lane.b32.xlu0 %v728, 108
    %v736 = vpop.permute.xlu0 %735
    %737 = vrot.lane.b32.xlu0 %v724, 98
    %v738 = vpop.permute.xlu0 %737
    %739 = vrot.lane.b32.xlu0 %v726, 98
    %v740 = vpop.permute.xlu0 %739
    %v741 = vmul.f32 %v730, %v629
    %v742 = vmul.f32 %v732, %v630
    %v743 = vmul.f32 %v724, %v734
    %v744 = vmul.f32 %v726, %v736
    %v745 = vadd.f32 %v741, %v743
    %v746 = vadd.f32 %v742, %v744
    %v747 = vtanh.pop %v745
    %v748 = vtanh.pop %v746
    %v749 = vmul.f32 %v738, %v747
    %v750 = vmul.f32 %v740, %v748
    %s751 = scalar_lea.vmem [#allocation2], 96
    %v752 = vld [vmem:[%s751] sm:$0xff]
    %v753 = vld [vmem:[%s751 + $0x8] sm:$0xff]
    %754 = vmatprep.subr.mxu0 0.0
    %755 = vmatpush1.msra.mxu0 %v55
    %756 = vmatprep.subr.mxu0 0.0
    %757 = vmatpush1.msra.mxu0 %v54
    %758 = vmatprep.subr.mxu0 0.0
    %759 = vmatpush1.msra.mxu0 %v53
    %760 = vmatprep.subr.mxu0 0.0
    %761 = vmatpush1.msra.mxu0 %v52
    %762 = vmatprep.subr.mxu0 0.0
    %763 = vmatpush1.msra.mxu0 %v51
    %764 = vmatprep.subr.mxu0 0.0
    %765 = vmatpush1.msra.mxu0 %v50
    %766 = vmatprep.subr.mxu0 0.0
    %767 = vmatpush1.msra.mxu0 %v49
    %768 = vmatprep.subr.mxu0 0.0
    %769 = vmatpush1.msra.mxu0 %v48
    %770 = vmatprep.subr.mxu0 0.0
    %771 = vmatpush1.msra.mxu0 %v47
    %772 = vmatprep.subr.mxu0 0.0
    %773 = vmatpush1.msra.mxu0 %v46
    %774 = vmatprep.subr.mxu0 0.0
    %775 = vmatpush1.msra.mxu0 %v45
    %776 = vmatprep.subr.mxu0 0.0
    %777 = vmatpush1.msra.mxu0 %v44
    %778 = vmatprep.subr.mxu0 0.0
    %779 = vmatpush1.msra.mxu0 %v43
    %780 = vmatprep.subr.mxu0 0.0
    %781 = vmatpush1.msra.mxu0 %v42
    %782 = vmatprep.subr.mxu0 0.0
    %783 = vmatpush1.msra.mxu0 %v41
    %784 = vmatprep.subr.mxu0 0.0
    %785 = vmatpush1.msra.mxu0 %v40
    %786 = vmatprep.subr.mxu0 0.0
    %787 = vmatpush2.msra.mxu0 0.0
    %788 = vmatprep.subr.mxu0 0.0
    %789 = vmatpush2.msra.mxu0 0.0
    %790 = vmatprep.subr.mxu0 0.0
    %791 = vmatpush2.msra.mxu0 0.0
    %792 = vmatprep.subr.mxu0 0.0
    %793 = vmatpush2.msra.mxu0 0.0
    %794 = vmatprep.subr.mxu0 0.0
    %795 = vmatpush2.msra.mxu0 0.0
    %796 = vmatprep.subr.mxu0 0.0
    %797 = vmatpush2.msra.mxu0 0.0
    %798 = vmatprep.subr.mxu0 0.0
    %799 = vmatpush2.msra.mxu0 0.0
    %800 = vmatprep.subr.mxu0 0.0
    %801 = vmatpush2.msra.mxu0 0.0
    %802 = vmatprep.subr.mxu0 0.0
    %803 = vmatpush2.msra.mxu0 0.0
    %804 = vmatprep.subr.mxu0 0.0
    %805 = vmatpush2.msra.mxu0 0.0
    %806 = vmatprep.subr.mxu0 0.0
    %807 = vmatpush2.msra.mxu0 0.0
    %808 = vmatprep.subr.mxu0 0.0
    %809 = vmatpush2.msra.mxu0 0.0
    %810 = vmatprep.subr.mxu0 0.0
    %811 = vmatpush2.msra.mxu0 0.0
    %812 = vmatprep.subr.mxu0 0.0
    %813 = vmatpush2.msra.mxu0 0.0
    %814 = vmatprep.subr.mxu0 0.0
    %815 = vmatpush2.msra.mxu0 0.0
    %816 = vmatprep.subr.mxu0 0.0
    %817 = vmatpush2.msra.mxu0 0.0
    %818 = vmatprep.mubr.f32.mxu0 0.0
    %819 = vmatmul.mubr.f32.gmra.mxu0 %v749
    %v820 = vpop.f32.mrf.mxu0
    %v821 = vadd.f32 0.0, %v820
    %v822 = vpop.f32.mrf.mxu0
    %823 = vmatprep.mubr.f32.mxu0 0.0
    %824 = vmatmul.mubr.f32.gmra.mxu0 %v750
    %v825 = vpop.f32.mrf.mxu0
    %v826 = vadd.f32 0.0, %v825
    %v827 = vpop.f32.mrf.mxu0
    %828 = vdwg.mxu0
    %v829 = vadd.f32 %v752, %v821
    %v830 = vadd.f32 %v753, %v826
    %v831 = vxor.u32 %v829, 2147483648
    %v832 = vxor.u32 %v830, 2147483648
    %v833 = vmul.f32 %v831, 1.442695
    %v834 = vpow.pop %v833
    %v835 = vmul.f32 %v832, 1.442695
    %v836 = vpow.pop %v835
    %v837 = vadd.f32 %v834, 1.0
    %v838 = vadd.f32 %v836, 1.0
    %v839 = vrcp.pop %v837
    %v840 = vmul.f32 1.0, %v839
    %v841 = vrcp.pop %v838
    %v842 = vmul.f32 1.0, %v841
    %v843 = vtanh.pop %v829
    %v844 = vtanh.pop %v830
    %845 = vrot.lane.b32.xlu0 %v840, 118
    %v846 = vpop.permute.xlu0 %845
    %847 = vrot.lane.b32.xlu0 %v842, 118
    %v848 = vpop.permute.xlu0 %847
    %849 = vrot.lane.b32.xlu0 %v843, 108
    %v850 = vpop.permute.xlu0 %849
    %851 = vrot.lane.b32.xlu0 %v844, 108
    %v852 = vpop.permute.xlu0 %851
    %853 = vrot.lane.b32.xlu0 %v840, 98
    %v854 = vpop.permute.xlu0 %853
    %855 = vrot.lane.b32.xlu0 %v842, 98
    %v856 = vpop.permute.xlu0 %855
    %v857 = vmul.f32 %v846, %v745
    %v858 = vmul.f32 %v848, %v746
    %v859 = vmul.f32 %v840, %v850
    %v860 = vmul.f32 %v842, %v852
    %v861 = vadd.f32 %v857, %v859
    %v862 = vadd.f32 %v858, %v860
    %v863 = vtanh.pop %v861
    %v864 = vtanh.pop %v862
    %v865 = vmul.f32 %v854, %v863
    %v866 = vmul.f32 %v856, %v864
    %s867 = scalar_lea.vmem [#allocation2], 112
    %v868 = vld [vmem:[%s867] sm:$0xff]
    %v869 = vld [vmem:[%s867 + $0x8] sm:$0xff]
    %870 = vmatprep.subr.mxu0 0.0
    %871 = vmatpush1.msra.mxu0 %v55
    %872 = vmatprep.subr.mxu0 0.0
    %873 = vmatpush1.msra.mxu0 %v54
    %874 = vmatprep.subr.mxu0 0.0
    %875 = vmatpush1.msra.mxu0 %v53
    %876 = vmatprep.subr.mxu0 0.0
    %877 = vmatpush1.msra.mxu0 %v52
    %878 = vmatprep.subr.mxu0 0.0
    %879 = vmatpush1.msra.mxu0 %v51
    %880 = vmatprep.subr.mxu0 0.0
    %881 = vmatpush1.msra.mxu0 %v50
    %882 = vmatprep.subr.mxu0 0.0
    %883 = vmatpush1.msra.mxu0 %v49
    %884 = vmatprep.subr.mxu0 0.0
    %885 = vmatpush1.msra.mxu0 %v48
    %886 = vmatprep.subr.mxu0 0.0
    %887 = vmatpush1.msra.mxu0 %v47
    %888 = vmatprep.subr.mxu0 0.0
    %889 = vmatpush1.msra.mxu0 %v46
    %890 = vmatprep.subr.mxu0 0.0
    %891 = vmatpush1.msra.mxu0 %v45
    %892 = vmatprep.subr.mxu0 0.0
    %893 = vmatpush1.msra.mxu0 %v44
    %894 = vmatprep.subr.mxu0 0.0
    %895 = vmatpush1.msra.mxu0 %v43
    %896 = vmatprep.subr.mxu0 0.0
    %897 = vmatpush1.msra.mxu0 %v42
    %898 = vmatprep.subr.mxu0 0.0
    %899 = vmatpush1.msra.mxu0 %v41
    %900 = vmatprep.subr.mxu0 0.0
    %901 = vmatpush1.msra.mxu0 %v40
    %902 = vmatprep.subr.mxu0 0.0
    %903 = vmatpush2.msra.mxu0 0.0
    %904 = vmatprep.subr.mxu0 0.0
    %905 = vmatpush2.msra.mxu0 0.0
    %906 = vmatprep.subr.mxu0 0.0
    %907 = vmatpush2.msra.mxu0 0.0
    %908 = vmatprep.subr.mxu0 0.0
    %909 = vmatpush2.msra.mxu0 0.0
    %910 = vmatprep.subr.mxu0 0.0
    %911 = vmatpush2.msra.mxu0 0.0
    %912 = vmatprep.subr.mxu0 0.0
    %913 = vmatpush2.msra.mxu0 0.0
    %914 = vmatprep.subr.mxu0 0.0
    %915 = vmatpush2.msra.mxu0 0.0
    %916 = vmatprep.subr.mxu0 0.0
    %917 = vmatpush2.msra.mxu0 0.0
    %918 = vmatprep.subr.mxu0 0.0
    %919 = vmatpush2.msra.mxu0 0.0
    %920 = vmatprep.subr.mxu0 0.0
    %921 = vmatpush2.msra.mxu0 0.0
    %922 = vmatprep.subr.mxu0 0.0
    %923 = vmatpush2.msra.mxu0 0.0
    %924 = vmatprep.subr.mxu0 0.0
    %925 = vmatpush2.msra.mxu0 0.0
    %926 = vmatprep.subr.mxu0 0.0
    %927 = vmatpush2.msra.mxu0 0.0
    %928 = vmatprep.subr.mxu0 0.0
    %929 = vmatpush2.msra.mxu0 0.0
    %930 = vmatprep.subr.mxu0 0.0
    %931 = vmatpush2.msra.mxu0 0.0
    %932 = vmatprep.subr.mxu0 0.0
    %933 = vmatpush2.msra.mxu0 0.0
    %934 = vmatprep.mubr.f32.mxu0 0.0
    %935 = vmatmul.mubr.f32.gmra.mxu0 %v865
    %v936 = vpop.f32.mrf.mxu0
    %v937 = vadd.f32 0.0, %v936
    %v938 = vpop.f32.mrf.mxu0
    %939 = vmatprep.mubr.f32.mxu0 0.0
    %940 = vmatmul.mubr.f32.gmra.mxu0 %v866
    %v941 = vpop.f32.mrf.mxu0
    %v942 = vadd.f32 0.0, %v941
    %v943 = vpop.f32.mrf.mxu0
    %944 = vdwg.mxu0
    %v945 = vadd.f32 %v868, %v937
    %v946 = vadd.f32 %v869, %v942
    %v947 = vxor.u32 %v945, 2147483648
    %v948 = vxor.u32 %v946, 2147483648
    %v949 = vmul.f32 %v947, 1.442695
    %v950 = vpow.pop %v949
    %v951 = vmul.f32 %v948, 1.442695
    %v952 = vpow.pop %v951
    %v953 = vadd.f32 %v950, 1.0
    %v954 = vadd.f32 %v952, 1.0
    %v955 = vrcp.pop %v953
    %v956 = vmul.f32 1.0, %v955
    %v957 = vrcp.pop %v954
    %v958 = vmul.f32 1.0, %v957
    %v959 = vtanh.pop %v945
    %v960 = vtanh.pop %v946
    %961 = vrot.lane.b32.xlu0 %v956, 118
    %v962 = vpop.permute.xlu0 %961
    %963 = vrot.lane.b32.xlu0 %v958, 118
    %v964 = vpop.permute.xlu0 %963
    %965 = vrot.lane.b32.xlu0 %v959, 108
    %v966 = vpop.permute.xlu0 %965
    %967 = vrot.lane.b32.xlu0 %v960, 108
    %v968 = vpop.permute.xlu0 %967
    %969 = vrot.lane.b32.xlu0 %v956, 98
    %v970 = vpop.permute.xlu0 %969
    %971 = vrot.lane.b32.xlu0 %v958, 98
    %v972 = vpop.permute.xlu0 %971
    %v973 = vmul.f32 %v962, %v861
    %v974 = vmul.f32 %v964, %v862
    %v975 = vmul.f32 %v956, %v966
    %v976 = vmul.f32 %v958, %v968
    %v977 = vadd.f32 %v973, %v975
    %v978 = vadd.f32 %v974, %v976
    %v979 = vtanh.pop %v977
    %v980 = vtanh.pop %v978
    %v981 = vmul.f32 %v970, %v979
    %v982 = vmul.f32 %v972, %v980
    %983 = vst [vmem:[#allocation7] sm:$0xff] %v981
    %984 = vst [vmem:[#allocation7 + $0x8] sm:$0xff] %v982
    // Predicated region
    $region18: #{tpu_custom_call.1} parent=1 // pred_check
      _
    $region19: #{tpu_custom_call.1} parent=1 // pred_check_branch
      %986 = sbr.rel (0) target = $region21
    $region20: #{tpu_custom_call.1} parent=1 // pred_region
      %s988 = ssub.s32 256, 256
      %989 = vsyncadd [#allocation4], %s988
      %s990 = sshll.u32 [#allocation7], 4
      %s991 = int_to_ptr.vmem [resolvable:$true] %s990
      %996 = dma.vmem_to_hbm [thread:$0]  %s991, 256, %s2, [#allocation4], 128, 128, 8
    $region21: #{tpu_custom_call.1} parent=1 // pred_fallthru
      _
    // Predicated region
    $region22: #{tpu_custom_call.1} parent=1 // pred_check
      _
    $region23: #{tpu_custom_call.1} parent=1 // pred_check_branch
      %998 = sbr.rel (0) target = $region25
    $region24: #{tpu_custom_call.1} parent=1 // pred_region
      %999 = dma.done [#allocation4], 256
    $region25: #{tpu_custom_call.1} parent=1 // pred_fallthru
      _
    %1000 = vsyncpa [#allocation3], 1
    %1001 = vsyncpa [#allocation6], 1
    %1002 = vsyncpa [#allocation4], 1

</llo_original>
